<compile_context>
chip_gen: v5e
topology: v5e:2x2
jax: 0.10.0
libtpu: 0.0.40
codegen_flags: <defaults>
</compile_context>

<pallas_src>
import functools

import jax
import jax.numpy as jnp
from jax import lax
from jax.experimental import pallas as pl
from jax.experimental.pallas import tpu as pltpu


# ----------------------------------------------------------------------------
# Wrapper-side helpers (tiny, shape-static precomputation).
# ----------------------------------------------------------------------------
def _interp_matrix(n_in, n_out):
    """(n_out, n_in) bilinear interpolation matrix, align_corners=True."""
    if n_out == 1:
        return jnp.zeros((1, n_in), jnp.float32).at[0, 0].set(1.0)
    pos = jnp.arange(n_out, dtype=jnp.float32) * ((n_in - 1) / (n_out - 1))
    i0 = jnp.clip(jnp.floor(pos).astype(jnp.int32), 0, n_in - 1)
    i1 = jnp.clip(i0 + 1, 0, n_in - 1)
    frac = pos - i0.astype(jnp.float32)
    rows = jnp.arange(n_out)
    a = jnp.zeros((n_out, n_in), jnp.float32)
    a = a.at[rows, i0].add(1.0 - frac)
    a = a.at[rows, i1].add(frac)
    return a


def _flat_interp_matrix_t(h_in, w_in, h_out, w_out):
    """Transposed flat-spatial interpolation matrix: (h_in*w_in, h_out*w_out)."""
    a_h = _interp_matrix(h_in, h_out)                       # (h_out, h_in)
    a_w = _interp_matrix(w_in, w_out)                       # (w_out, w_in)
    m = jnp.einsum('hi,wj->hwij', a_h, a_w).reshape(h_out * w_out, h_in * w_in)
    return m.T.astype(jnp.float32)


def _tap_masks(H, W):
    """(8, H*W) f32 combined border masks for the 8 non-center 3x3 taps.

    Row order matches (dh, dw) iteration with the center tap skipped.
    """
    hh = jnp.repeat(jnp.arange(H), W).astype(jnp.float32)
    ww = jnp.tile(jnp.arange(W), H).astype(jnp.float32)
    rows = []
    for dh in range(3):
        for dw in range(3):
            if dh == 1 and dw == 1:
                continue
            m = jnp.ones((H * W,), jnp.float32)
            if dh == 0:
                m = m * (hh >= 1)
            elif dh == 2:
                m = m * (hh <= H - 2)
            if dw == 0:
                m = m * (ww >= 1)
            elif dw == 2:
                m = m * (ww <= W - 2)
            rows.append(m)
    return jnp.stack(rows, axis=0)                           # (8, H*W)


# ----------------------------------------------------------------------------
# Fused Pallas kernel: (resize+concat) matmul + 3x3 conv (im2col, one matmul)
# + folded BN shift + LeakyReLU.  One grid step per batch element.
# ----------------------------------------------------------------------------
def fused_kernel(x_ref, mt_ref, w9_ref, shift_ref, mask_ref, o_ref,
                 *, H, W, slope):
    HW = H * W

    # Single block-diagonal resize matmul: channels on sublanes, spatial on lanes.
    # Produces the already-concatenated upsampled feature slab f = [up_x1; up_x2].
    f = jnp.dot(x_ref[...], mt_ref[...],
                preferred_element_type=jnp.float32)           # (Cin, HW)

    # im2col in-register: 8 lane-rolls (XLU) + 1 combined border-mask mult (VPU)
    # per non-center tap; center tap is f itself.  Stack along sublanes.
    taps = []
    mi = 0
    for dh in range(3):
        for dw in range(3):
            if dh == 1 and dw == 1:
                taps.append(f)
                continue
            s = (dh - 1) * W + (dw - 1)                       # flat-spatial shift
            tap = pltpu.roll(f, shift=(-s) % HW, axis=1) if (s % HW) != 0 else f
            tap = tap * mask_ref[mi:mi + 1, :]
            mi += 1
            taps.append(tap)
    patches = jnp.concatenate(taps, axis=0)                   # (9*Cin, HW)

    # 3x3 conv (+folded BN scale) as one MXU matmul; then shift + LeakyReLU.
    y = jnp.dot(w9_ref[...], patches,
                preferred_element_type=jnp.float32)           # (Cout, HW)
    y = y + shift_ref[...]                                    # (Cout, 1) broadcast
    o_ref[...] = jnp.maximum(y, slope * y).astype(o_ref.dtype)


# ----------------------------------------------------------------------------
# Wrapper: full ExtractAtResolution forward.  Inputs / output are NCHW.
# ----------------------------------------------------------------------------
def extract_at_resolution(x1_nchw, x2_nchw, target_size, params, eps=1e-5):
    B, C1, H1, W1 = x1_nchw.shape
    _, C2, H2, W2 = x2_nchw.shape
    H, W = target_size
    HW = H * W
    Cin = C1 + C2
    L1, L2 = H1 * W1, H2 * W2
    L = L1 + L2

    # Flatten spatial dims (free reshape, channels-first: zero layout transposes)
    # and build the block-diagonal combined input slab (B, Cin, L1+L2).
    x1f = x1_nchw.reshape(B, C1, L1).astype(jnp.float32)
    x2f = x2_nchw.reshape(B, C2, L2).astype(jnp.float32)
    x1p = jnp.pad(x1f, ((0, 0), (0, 0), (0, L2)))             # (B, C1, L)
    x2p = jnp.pad(x2f, ((0, 0), (0, 0), (L1, 0)))             # (B, C2, L)
    xc = jnp.concatenate([x1p, x2p], axis=1)                  # (B, Cin, L)

    # Stacked transposed interpolation matrices: block-diag matmul does both
    # resizes AND the channel concat in one MXU contraction.
    m1t = _flat_interp_matrix_t(H1, W1, H, W)                 # (L1, HW)
    m2t = _flat_interp_matrix_t(H2, W2, H, W)                 # (L2, HW)
    mct = jnp.concatenate([m1t, m2t], axis=0)                 # (L, HW)

    masks = _tap_masks(H, W)                                  # (8, HW)

    # Fold conv bias + eval-mode BatchNorm: scale into weights, shift post-matmul.
    scale = params['bn_gamma'] / jnp.sqrt(params['bn_var'] + eps)       # (Cout,)
    shift = (params['conv_b'] - params['bn_mean']) * scale + params['bn_beta']
    w_hwio = jnp.transpose(params['conv_w'], (2, 3, 1, 0))              # (3,3,Cin,Cout)
    Cout = w_hwio.shape[-1]
    w9 = (w_hwio * scale[None, None, None, :]).reshape(9 * Cin, Cout).T
    w9 = w9.astype(jnp.float32)                                         # (Cout, 9*Cin)
    shift2 = shift.reshape(Cout, 1).astype(jnp.float32)                 # (Cout, 1)

    kernel = functools.partial(fused_kernel, H=H, W=W, slope=0.01)

    out_flat = pl.pallas_call(
        kernel,
        out_shape=jax.ShapeDtypeStruct((B, Cout, HW), jnp.float32),
        grid=(B,),
        in_specs=[
            pl.BlockSpec((None, Cin, L), lambda b: (b, 0, 0)),
            pl.BlockSpec((L, HW), lambda b: (0, 0)),
            pl.BlockSpec((Cout, 9 * Cin), lambda b: (0, 0)),
            pl.BlockSpec((Cout, 1), lambda b: (0, 0)),
            pl.BlockSpec((8, HW), lambda b: (0, 0)),
        ],
        out_specs=pl.BlockSpec((None, Cout, HW), lambda b: (b, 0, 0)),
        compiler_params=pltpu.CompilerParams(
            dimension_semantics=("parallel",)),
    )(xc, mct, w9, shift2, masks)

    # (B, Cout, H*W) -> (B, Cout, H, W): pure reshape, already NCHW.
    return out_flat.reshape(B, Cout, H, W)


# ----------------------------------------------------------------------------
# Pure-JAX reference (gather bilinear + lax.conv + BN + LeakyReLU) for checking.
# ----------------------------------------------------------------------------
def bilinear_align_corners_nhwc(x, target_size):
    B, H, W, C = x.shape
    Ht, Wt = target_size

    def coords(n_in, n_out):
        if n_out == 1:
            return jnp.zeros((1,), jnp.float32)
        return jnp.arange(n_out, dtype=jnp.float32) * ((n_in - 1) / (n_out - 1))

    hc = coords(H, Ht)
    wc = coords(W, Wt)

    h0 = jnp.clip(jnp.floor(hc).astype(jnp.int32), 0, H - 1)
    h1 = jnp.clip(h0 + 1, 0, H - 1)
    wh = (hc - h0.astype(jnp.float32))[None, :, None, None]

    w0 = jnp.clip(jnp.floor(wc).astype(jnp.int32), 0, W - 1)
    w1 = jnp.clip(w0 + 1, 0, W - 1)
    ww = (wc - w0.astype(jnp.float32))[None, None, :, None]

    xr = x[:, h0, :, :] * (1.0 - wh) + x[:, h1, :, :] * wh
    return xr[:, :, w0, :] * (1.0 - ww) + xr[:, :, w1, :] * ww


def reference(x1_nchw, x2_nchw, target_size, params, eps=1e-5):
    x1 = jnp.transpose(x1_nchw, (0, 2, 3, 1))
    x2 = jnp.transpose(x2_nchw, (0, 2, 3, 1))
    u1 = bilinear_align_corners_nhwc(x1, target_size)
    u2 = bilinear_align_corners_nhwc(x2, target_size)
    f = jnp.concatenate([u1, u2], axis=-1)
    w_hwio = jnp.transpose(params['conv_w'], (2, 3, 1, 0))
    y = lax.conv_general_dilated(
        f, w_hwio, window_strides=(1, 1), padding='SAME',
        dimension_numbers=('NHWC', 'HWIO', 'NHWC'))
    y = y + params['conv_b'][None, None, None, :]
    scale = params['bn_gamma'] / jnp.sqrt(params['bn_var'] + eps)
    y = (y - params['bn_mean']) * scale + params['bn_beta']
    y = jnp.where(y >= 0, y, 0.01 * y)
    return jnp.transpose(y, (0, 3, 1, 2))


if __name__ == "__main__":
    key = jax.random.PRNGKey(0)
    k1, k2, kw, kb, kg, kbe = jax.random.split(key, 6)

    B = 2
    c1, c2 = 4, 4
    in_channels = c1 + c2          # concat channel dim
    out_channels = 8
    target_size = (16, 16)

    # x1 / x2 at different (smaller) resolutions, as the module implies.
    x1 = jax.random.normal(k1, (B, c1, 8, 8), dtype=jnp.float32)
    x2 = jax.random.normal(k2, (B, c2, 4, 4), dtype=jnp.float32)

    params = {
        'conv_w': 0.1 * jax.random.normal(
            kw, (out_channels, in_channels, 3, 3), dtype=jnp.float32),
        'conv_b': 0.1 * jax.random.normal(kb, (out_channels,), dtype=jnp.float32),
        'bn_gamma': 1.0 + 0.1 * jax.random.normal(kg, (out_channels,), dtype=jnp.float32),
        'bn_beta': 0.1 * jax.random.normal(kbe, (out_channels,), dtype=jnp.float32),
        'bn_mean': jnp.zeros((out_channels,), dtype=jnp.float32),
        'bn_var': jnp.ones((out_channels,), dtype=jnp.float32),
    }

    out = extract_at_resolution(x1, x2, target_size, params)
    jax.block_until_ready(out)

    ref = reference(x1, x2, target_size, params)
    assert out.shape == (B, out_channels, target_size[0], target_size[1])
    assert jnp.allclose(out, ref, atol=1e-4, rtol=1e-4), "mismatch vs reference"

    print("KERNEL_OK")
</pallas_src>

<mosaic_0001>
module attributes {stable_mosaic.version = 11 : i64} {
  func.func @fused_kernel(%arg0: i32, %arg1: memref<1x8x80xf32, #tpu.memory_space<vmem>>, %arg2: memref<80x256xf32, #tpu.memory_space<vmem>>, %arg3: memref<8x72xf32, #tpu.memory_space<vmem>>, %arg4: memref<8x1xf32, #tpu.memory_space<vmem>>, %arg5: memref<8x256xf32, #tpu.memory_space<vmem>>, %arg6: memref<1x8x256xf32, #tpu.memory_space<vmem>>) attributes {dimension_semantics = [#tpu.dimension_semantics<parallel>], iteration_bounds = array<i64: 2>, scalar_prefetch = 0 : i64, scratch_operands = 0 : i64, tpu.core_type = #tpu.core_type<tc>, window_params = [{transform_indices = @transform_0, window_bounds = array<i64: 1, 8, 80>}, {pipeline_mode = #tpu.pipeline_mode<synchronous>, transform_indices = @transform_1, window_bounds = array<i64: 80, 256>}, {pipeline_mode = #tpu.pipeline_mode<synchronous>, transform_indices = @transform_2, window_bounds = array<i64: 8, 72>}, {pipeline_mode = #tpu.pipeline_mode<synchronous>, transform_indices = @transform_3, window_bounds = array<i64: 8, 1>}, {pipeline_mode = #tpu.pipeline_mode<synchronous>, transform_indices = @transform_4, window_bounds = array<i64: 8, 256>}, {transform_indices = @transform_5, window_bounds = array<i64: 1, 8, 256>}]} {
    %c0 = arith.constant 0 : index
    %c0_0 = arith.constant 0 : index
    %c0_1 = arith.constant 0 : index
    %0 = vector.load %arg1[%c0, %c0_0, %c0_1] : memref<1x8x80xf32, #tpu.memory_space<vmem>>, vector<1x8x80xf32>
    %1 = vector.shape_cast %0 : vector<1x8x80xf32> to vector<8x80xf32>
    %c0_2 = arith.constant 0 : index
    %c0_3 = arith.constant 0 : index
    %2 = vector.load %arg2[%c0_2, %c0_3] : memref<80x256xf32, #tpu.memory_space<vmem>>, vector<80x256xf32>
    %cst = arith.constant dense<0.000000e+00> : vector<8x256xf32>
    %3 = tpu.matmul %1, %2, %cst {dimension_numbers = #tpu.dot_dimension_numbers<[1], [0], [0], [1], [0, 0, 1, 1], [], []>} : vector<8x80xf32>, vector<80x256xf32>, vector<8x256xf32> -> vector<8x256xf32>
    %c17_i32 = arith.constant 17 : i32
    %4 = tpu.dynamic_rotate %3 by %c17_i32 dim 1 : vector<8x256xf32>, i32 -> vector<8x256xf32>
    %c0_4 = arith.constant 0 : index
    %c0_5 = arith.constant 0 : index
    %5 = vector.load %arg5[%c0_4, %c0_5] : memref<8x256xf32, #tpu.memory_space<vmem>>, vector<1x256xf32>
    %6 = vector.broadcast %5 : vector<1x256xf32> to vector<8x256xf32>
    %7 = arith.mulf %4, %6 : vector<8x256xf32>
    %c16_i32 = arith.constant 16 : i32
    %8 = tpu.dynamic_rotate %3 by %c16_i32 dim 1 : vector<8x256xf32>, i32 -> vector<8x256xf32>
    %c1 = arith.constant 1 : index
    %c0_6 = arith.constant 0 : index
    %9 = vector.load %arg5[%c1, %c0_6] : memref<8x256xf32, #tpu.memory_space<vmem>>, vector<1x256xf32>
    %10 = vector.broadcast %9 : vector<1x256xf32> to vector<8x256xf32>
    %11 = arith.mulf %8, %10 : vector<8x256xf32>
    %c15_i32 = arith.constant 15 : i32
    %12 = tpu.dynamic_rotate %3 by %c15_i32 dim 1 : vector<8x256xf32>, i32 -> vector<8x256xf32>
    %c2 = arith.constant 2 : index
    %c0_7 = arith.constant 0 : index
    %13 = vector.load %arg5[%c2, %c0_7] : memref<8x256xf32, #tpu.memory_space<vmem>>, vector<1x256xf32>
    %14 = vector.broadcast %13 : vector<1x256xf32> to vector<8x256xf32>
    %15 = arith.mulf %12, %14 : vector<8x256xf32>
    %c1_i32 = arith.constant 1 : i32
    %16 = tpu.dynamic_rotate %3 by %c1_i32 dim 1 : vector<8x256xf32>, i32 -> vector<8x256xf32>
    %c3 = arith.constant 3 : index
    %c0_8 = arith.constant 0 : index
    %17 = vector.load %arg5[%c3, %c0_8] : memref<8x256xf32, #tpu.memory_space<vmem>>, vector<1x256xf32>
    %18 = vector.broadcast %17 : vector<1x256xf32> to vector<8x256xf32>
    %19 = arith.mulf %16, %18 : vector<8x256xf32>
    %c255_i32 = arith.constant 255 : i32
    %20 = tpu.dynamic_rotate %3 by %c255_i32 dim 1 : vector<8x256xf32>, i32 -> vector<8x256xf32>
    %c4 = arith.constant 4 : index
    %c0_9 = arith.constant 0 : index
    %21 = vector.load %arg5[%c4, %c0_9] : memref<8x256xf32, #tpu.memory_space<vmem>>, vector<1x256xf32>
    %22 = vector.broadcast %21 : vector<1x256xf32> to vector<8x256xf32>
    %23 = arith.mulf %20, %22 : vector<8x256xf32>
    %c241_i32 = arith.constant 241 : i32
    %24 = tpu.dynamic_rotate %3 by %c241_i32 dim 1 : vector<8x256xf32>, i32 -> vector<8x256xf32>
    %c5 = arith.constant 5 : index
    %c0_10 = arith.constant 0 : index
    %25 = vector.load %arg5[%c5, %c0_10] : memref<8x256xf32, #tpu.memory_space<vmem>>, vector<1x256xf32>
    %26 = vector.broadcast %25 : vector<1x256xf32> to vector<8x256xf32>
    %27 = arith.mulf %24, %26 : vector<8x256xf32>
    %c240_i32 = arith.constant 240 : i32
    %28 = tpu.dynamic_rotate %3 by %c240_i32 dim 1 : vector<8x256xf32>, i32 -> vector<8x256xf32>
    %c6 = arith.constant 6 : index
    %c0_11 = arith.constant 0 : index
    %29 = vector.load %arg5[%c6, %c0_11] : memref<8x256xf32, #tpu.memory_space<vmem>>, vector<1x256xf32>
    %30 = vector.broadcast %29 : vector<1x256xf32> to vector<8x256xf32>
    %31 = arith.mulf %28, %30 : vector<8x256xf32>
    %c239_i32 = arith.constant 239 : i32
    %32 = tpu.dynamic_rotate %3 by %c239_i32 dim 1 : vector<8x256xf32>, i32 -> vector<8x256xf32>
    %c7 = arith.constant 7 : index
    %c0_12 = arith.constant 0 : index
    %33 = vector.load %arg5[%c7, %c0_12] : memref<8x256xf32, #tpu.memory_space<vmem>>, vector<1x256xf32>
    %34 = vector.broadcast %33 : vector<1x256xf32> to vector<8x256xf32>
    %35 = arith.mulf %32, %34 : vector<8x256xf32>
    %36 = tpu.concatenate %7, %11, %15, %19, %3, %23, %27, %31, %35 in 0 : vector<8x256xf32>, vector<8x256xf32>, vector<8x256xf32>, vector<8x256xf32>, vector<8x256xf32>, vector<8x256xf32>, vector<8x256xf32>, vector<8x256xf32>, vector<8x256xf32> -> vector<72x256xf32>
    %c0_13 = arith.constant 0 : index
    %c0_14 = arith.constant 0 : index
    %37 = vector.load %arg3[%c0_13, %c0_14] : memref<8x72xf32, #tpu.memory_space<vmem>>, vector<8x72xf32>
    %cst_15 = arith.constant dense<0.000000e+00> : vector<8x256xf32>
    %38 = tpu.matmul %37, %36, %cst_15 {dimension_numbers = #tpu.dot_dimension_numbers<[1], [0], [0], [1], [0, 0, 1, 1], [], []>} : vector<8x72xf32>, vector<72x256xf32>, vector<8x256xf32> -> vector<8x256xf32>
    %c0_16 = arith.constant 0 : index
    %c0_17 = arith.constant 0 : index
    %39 = vector.load %arg4[%c0_16, %c0_17] : memref<8x1xf32, #tpu.memory_space<vmem>>, vector<8x1xf32>
    %40 = vector.broadcast %39 : vector<8x1xf32> to vector<8x256xf32>
    %41 = arith.addf %38, %40 : vector<8x256xf32>
    %cst_18 = arith.constant 0.00999999977 : f32
    %42 = vector.broadcast %cst_18 : f32 to vector<8x256xf32>
    %43 = arith.mulf %42, %41 : vector<8x256xf32>
    %44 = arith.maximumf %41, %43 : vector<8x256xf32>
    %c0_19 = arith.constant 0 : index
    %c0_20 = arith.constant 0 : index
    %c0_21 = arith.constant 0 : index
    %45 = vector.load %arg6[%c0_19, %c0_20, %c0_21] : memref<1x8x256xf32, #tpu.memory_space<vmem>>, vector<1x8x256xf32>
    %46 = vector.shape_cast %45 : vector<1x8x256xf32> to vector<8x256xf32>
    %47 = vector.shape_cast %44 : vector<8x256xf32> to vector<1x8x256xf32>
    tpu.vector_store %arg6[%c0_19, %c0_20, %c0_21], %47 {strides = array<i32>} : memref<1x8x256xf32, #tpu.memory_space<vmem>>, vector<1x8x256xf32>,
    return
  }
  func.func @transform_0(%arg0: i32) -> (i32, i32, i32) {
    %c0_i32 = arith.constant 0 : i32
    %c0_i32_0 = arith.constant 0 : i32
    %c0_i32_1 = arith.constant 0 : i32
    return %arg0, %c0_i32, %c0_i32_0 : i32, i32, i32
  }
  func.func @transform_1(%arg0: i32) -> (i32, i32) {
    %c0_i32 = arith.constant 0 : i32
    %c0_i32_0 = arith.constant 0 : i32
    %c0_i32_1 = arith.constant 0 : i32
    return %c0_i32, %c0_i32_0 : i32, i32
  }
  func.func @transform_2(%arg0: i32) -> (i32, i32) {
    %c0_i32 = arith.constant 0 : i32
    %c0_i32_0 = arith.constant 0 : i32
    %c0_i32_1 = arith.constant 0 : i32
    return %c0_i32, %c0_i32_0 : i32, i32
  }
  func.func @transform_3(%arg0: i32) -> (i32, i32) {
    %c0_i32 = arith.constant 0 : i32
    %c0_i32_0 = arith.constant 0 : i32
    %c0_i32_1 = arith.constant 0 : i32
    return %c0_i32, %c0_i32_0 : i32, i32
  }
  func.func @transform_4(%arg0: i32) -> (i32, i32) {
    %c0_i32 = arith.constant 0 : i32
    %c0_i32_0 = arith.constant 0 : i32
    %c0_i32_1 = arith.constant 0 : i32
    return %c0_i32, %c0_i32_0 : i32, i32
  }
  func.func @transform_5(%arg0: i32) -> (i32, i32, i32) {
    %c0_i32 = arith.constant 0 : i32
    %c0_i32_0 = arith.constant 0 : i32
    %c0_i32_1 = arith.constant 0 : i32
    return %arg0, %c0_i32, %c0_i32_0 : i32, i32, i32
  }
}

</mosaic_0001>

<llo_original>
// kernel: tpu_custom_call.1
$region0: #{tpu_custom_call.1}
  #allocation0 [shape = 'u32[]', space=smem, size = 0x4, offset = 0x4, fixed_abs, tag = 'smem constant byte address 0x4 - core index']
  #allocation1 [shape = 'u32[72,128]{1,0:T(1,128)}', space=vmem, size = 0x9000, scoped, tag = 'internal scratch']
  %s0 = inlined_call_operand.hbm [shape: f32[2,8,80], index: 0, kind: input, shape index: {}]
  %s1 = inlined_call_operand.hbm [shape: f32[80,256], index: 1, kind: input, shape index: {}]
  %s2 = inlined_call_operand.vmem [shape: f32[8,72], index: 2, kind: input, shape index: {}]
  %s3 = inlined_call_operand.vmem [shape: f32[8,1], index: 3, kind: input, shape index: {}]
  %s4 = inlined_call_operand.hbm [shape: f32[8,256], index: 4, kind: input, shape index: {}]
  %s5 = inlined_call_operand.hbm [shape: f32[2,8,256], index: 5, kind: output, shape index: {}]
  %s6 = sld [smem:[#allocation0]]
  $region65: #{tpu_custom_call.1} parent=0
    _
  %s8 = ssub.s32 1, %s6
  %s9 = scalar_select 0, %s8, %s6
  $region1: #{tpu_custom_call.1} parent=0
    #allocation2 [shape = 'u8[8192]{0}', space=vmem, size = 0x2000, scoped, tag = 'input window, operand 0']
    #allocation3 [shape = 's32[2]{0}', space=sflag, size = 0x8, scoped, tag = 'scoped memory for tpu_custom_call.1']
    #allocation4 [shape = 's32[2]{0}', space=sflag, size = 0x8, scoped, tag = 'scoped memory for tpu_custom_call.1']
    #allocation5 [shape = 'u8[81920]{0}', space=vmem, size = 0x14000, scoped, tag = 'input window, operand 1, single buffered']
    #allocation6 [shape = 's32[1]{0}', space=sflag, size = 0x4, scoped, tag = 'scoped memory for tpu_custom_call.1']
    #allocation7 [shape = 'u8[8192]{0}', space=vmem, size = 0x2000, scoped, tag = 'input window, operand 4, single buffered']
    #allocation8 [shape = 'u8[16384]{0}', space=vmem, size = 0x4000, scoped, tag = 'output window, operand 0']
    %10 = vsyncpa [#allocation3], 0
    %s11 = scalar_lea.sflag [#allocation3], 1
    %12 = vsyncpa %s11, 0
    %13 = vsyncpa [#allocation6], 0
    %14 = vsyncpa [#allocation4], 0
    %s15 = scalar_lea.sflag [#allocation4], 1
    %16 = vsyncpa %s15, 0
    loop: start=0, step=1, limit=4
    $region2: #{tpu_custom_call.1} parent=1 // loop_pre_header
      _
    $region3: #{tpu_custom_call.1} parent=1 // loop_header
      %s18 = sphi 0, %s22
      %p19 = scmp.ge.s32.totalorder %s18, 4
      %s28 = sphi 0, %s30
      %s31 = sphi 0, %s28
      %s32 = sphi 0, %s31
      %s48 = sphi 0, %s32
      %s52 = sphi 0, %s52
      %s54 = sphi 0, %s52
      %s55 = sphi 0, %s54
      %s69 = sphi 0, %s55
      %s73 = sphi 0, %s73
      %s75 = sphi 0, %s73
      %s76 = sphi 0, %s75
      %s90 = sphi 0, %s76
      %s94 = sphi 0, %s94
      %s96 = sphi 0, %s94
      %s97 = sphi 0, %s96
      %s111 = sphi 0, %s97
      %s115 = sphi 0, %s115
      %s117 = sphi 0, %s115
      %s118 = sphi 0, %s117
      %s132 = sphi 0, %s118
      %s138 = sphi 0, %s140
      %s141 = sphi 0, %s138
      %s142 = sphi 0, %s141
      %s158 = sphi 0, %s142
    $region4: #{tpu_custom_call.1} parent=1 // loop_header_branch
      %21 = sbr.rel (%p19) target = $region8
    $region5: #{tpu_custom_call.1} parent=1 // loop_body
      %s23 = ssub.s32 %s18, 1
      %s24 = ssub.s32 %s18, 2
      %s25 = sadd.s32 %s18, 1
      %s26 = ssub.s32 %s18, %s25
      %p27 = scmp.eq.s32.totalorder %s26, 0
      %s29 = sadd.s32 %s28, 1
      %s30 = scalar_select %p27, %s28, %s29
      %p33 = pneg %p27
      %p34 = scmp.eq.s32.totalorder %s18, 1
      %p35 = por %p33, %p34
      %p36 = scmp.ne.s32.totalorder %s28, %s31
      %p37 = scmp.eq.s32.totalorder %s18, 0
      %p38 = por %p36, %p37
      %p39 = scmp.ne.s32.totalorder %s28, %s31
      %p40 = scmp.eq.s32.totalorder %s23, 1
      %p41 = por %p39, %p40
      %p42 = scmp.ne.s32.totalorder %s31, %s32
      %p43 = scmp.eq.s32.totalorder %s23, 0
      %p44 = por %p42, %p43
      %p45 = scmp.ne.s32.totalorder %s31, %s32
      %p46 = scmp.eq.s32.totalorder %s24, 1
      %p47 = por %p45, %p46
      %p49 = scmp.ne.s32.totalorder %s32, %s48
      %p50 = scmp.eq.s32.totalorder %s24, 0
      %p51 = por %p49, %p50
      %s53 = sadd.s32 %s52, 1
      %p56 = scmp.eq.s32.totalorder %s18, 1
      %p57 = scmp.ne.s32.totalorder %s52, %s54
      %p58 = scmp.eq.s32.totalorder %s18, 0
      %p59 = por %p57, %p58
      %p60 = scmp.ne.s32.totalorder %s52, %s54
      %p61 = scmp.eq.s32.totalorder %s23, 1
      %p62 = por %p60, %p61
      %p63 = scmp.ne.s32.totalorder %s54, %s55
      %p64 = scmp.eq.s32.totalorder %s23, 0
      %p65 = por %p63, %p64
      %p66 = scmp.ne.s32.totalorder %s54, %s55
      %p67 = scmp.eq.s32.totalorder %s24, 1
      %p68 = por %p66, %p67
      %p70 = scmp.ne.s32.totalorder %s55, %s69
      %p71 = scmp.eq.s32.totalorder %s24, 0
      %p72 = por %p70, %p71
      %s74 = sadd.s32 %s73, 1
      %p77 = scmp.eq.s32.totalorder %s18, 1
      %p78 = scmp.ne.s32.totalorder %s73, %s75
      %p79 = scmp.eq.s32.totalorder %s18, 0
      %p80 = por %p78, %p79
      %p81 = scmp.ne.s32.totalorder %s73, %s75
      %p82 = scmp.eq.s32.totalorder %s23, 1
      %p83 = por %p81, %p82
      %p84 = scmp.ne.s32.totalorder %s75, %s76
      %p85 = scmp.eq.s32.totalorder %s23, 0
      %p86 = por %p84, %p85
      %p87 = scmp.ne.s32.totalorder %s75, %s76
      %p88 = scmp.eq.s32.totalorder %s24, 1
      %p89 = por %p87, %p88
      %p91 = scmp.ne.s32.totalorder %s76, %s90
      %p92 = scmp.eq.s32.totalorder %s24, 0
      %p93 = por %p91, %p92
      %s95 = sadd.s32 %s94, 1
      %p98 = scmp.eq.s32.totalorder %s18, 1
      %p99 = scmp.ne.s32.totalorder %s94, %s96
      %p100 = scmp.eq.s32.totalorder %s18, 0
      %p101 = por %p99, %p100
      %p102 = scmp.ne.s32.totalorder %s94, %s96
      %p103 = scmp.eq.s32.totalorder %s23, 1
      %p104 = por %p102, %p103
      %p105 = scmp.ne.s32.totalorder %s96, %s97
      %p106 = scmp.eq.s32.totalorder %s23, 0
      %p107 = por %p105, %p106
      %p108 = scmp.ne.s32.totalorder %s96, %s97
      %p109 = scmp.eq.s32.totalorder %s24, 1
      %p110 = por %p108, %p109
      %p112 = scmp.ne.s32.totalorder %s97, %s111
      %p113 = scmp.eq.s32.totalorder %s24, 0
      %p114 = por %p112, %p113
      %s116 = sadd.s32 %s115, 1
      %p119 = scmp.eq.s32.totalorder %s18, 1
      %p120 = scmp.ne.s32.totalorder %s115, %s117
      %p121 = scmp.eq.s32.totalorder %s18, 0
      %p122 = por %p120, %p121
      %p123 = scmp.ne.s32.totalorder %s115, %s117
      %p124 = scmp.eq.s32.totalorder %s23, 1
      %p125 = por %p123, %p124
      %p126 = scmp.ne.s32.totalorder %s117, %s118
      %p127 = scmp.eq.s32.totalorder %s23, 0
      %p128 = por %p126, %p127
      %p129 = scmp.ne.s32.totalorder %s117, %s118
      %p130 = scmp.eq.s32.totalorder %s24, 1
      %p131 = por %p129, %p130
      %p133 = scmp.ne.s32.totalorder %s118, %s132
      %p134 = scmp.eq.s32.totalorder %s24, 0
      %p135 = por %p133, %p134
      %s136 = ssub.s32 %s18, %s25
      %p137 = scmp.eq.s32.totalorder %s136, 0
      %s139 = sadd.s32 %s138, 1
      %s140 = scalar_select %p137, %s138, %s139
      %p143 = pneg %p137
      %p144 = scmp.eq.s32.totalorder %s18, 1
      %p145 = por %p143, %p144
      %p146 = scmp.ne.s32.totalorder %s138, %s141
      %p147 = scmp.eq.s32.totalorder %s18, 0
      %p148 = por %p146, %p147
      %p149 = scmp.ne.s32.totalorder %s138, %s141
      %p150 = scmp.eq.s32.totalorder %s23, 1
      %p151 = por %p149, %p150
      %p152 = scmp.ne.s32.totalorder %s141, %s142
      %p153 = scmp.eq.s32.totalorder %s23, 0
      %p154 = por %p152, %p153
      %p155 = scmp.ne.s32.totalorder %s141, %s142
      %p156 = scmp.eq.s32.totalorder %s24, 1
      %p157 = por %p155, %p156
      %p159 = scmp.ne.s32.totalorder %s142, %s158
      %p160 = scmp.eq.s32.totalorder %s24, 0
      %p161 = por %p159, %p160
      %p162 = scmp.le.s32.totalorder 1, %s18
      %p163 = scmp.lt.s32.totalorder %s18, 3
      %p164 = pnand %p162, %p163
      %p165 = pneg %p164
      // Predicated region
      $region9: #{tpu_custom_call.1} parent=5 // pred_check
        _
      $region10: #{tpu_custom_call.1} parent=5 // pred_check_branch
        %167 = sbr.rel (%p164) target = $region12
      $region11: #{tpu_custom_call.1} parent=5 // pred_region
        %s168 = ssub.s32 %s18, 1
        // Predicated region
        $region13: #{tpu_custom_call.1} parent=11 // pred_check
          %p169 = pneg %p65
        $region14: #{tpu_custom_call.1} parent=11 // pred_check_branch
          %171 = sbr.rel (%p169) target = $region16
        $region15: #{tpu_custom_call.1} parent=11 // pred_region
          %173 = vsyncadd [#allocation6], 0
          %s174 = sshll.u32 %s1, 4
          %s175 = int_to_ptr.hbm [resolvable:$true] %s174
          %s176 = sshll.u32 [#allocation5], 4
          %s177 = int_to_ptr.vmem [resolvable:$true] %s176
          %182 = dma.hbm_to_vmem [thread:$0]  %s175, 2560, %s177, [#allocation6], 256, 256, 16
        $region16: #{tpu_custom_call.1} parent=11 // pred_fallthru
          _
        // Predicated region
        $region17: #{tpu_custom_call.1} parent=11 // pred_check
          %p183 = pneg %p86
        $region18: #{tpu_custom_call.1} parent=11 // pred_check_branch
          %185 = sbr.rel (%p183) target = $region20
        $region19: #{tpu_custom_call.1} parent=11 // pred_region
          _
        $region20: #{tpu_custom_call.1} parent=11 // pred_fallthru
          _
        // Predicated region
        $region21: #{tpu_custom_call.1} parent=11 // pred_check
          %p186 = pneg %p107
        $region22: #{tpu_custom_call.1} parent=11 // pred_check_branch
          %188 = sbr.rel (%p186) target = $region24
        $region23: #{tpu_custom_call.1} parent=11 // pred_region
          _
        $region24: #{tpu_custom_call.1} parent=11 // pred_fallthru
          _
        // Predicated region
        $region25: #{tpu_custom_call.1} parent=11 // pred_check
          %p189 = pneg %p128
        $region26: #{tpu_custom_call.1} parent=11 // pred_check_branch
          %191 = sbr.rel (%p189) target = $region28
        $region27: #{tpu_custom_call.1} parent=11 // pred_region
          %193 = vsyncadd [#allocation6], 0
          %s195 = sshll.u32 %s4, 4
          %s196 = int_to_ptr.hbm [resolvable:$true] %s195
          %s197 = sshll.u32 [#allocation7], 4
          %s198 = int_to_ptr.vmem [resolvable:$true] %s197
          %200 = dma.hbm_to_vmem [thread:$0]  %s196, 256, %s198, [#allocation6]
        $region28: #{tpu_custom_call.1} parent=11 // pred_fallthru
          _
      $region12: #{tpu_custom_call.1} parent=5 // pred_fallthru
        _
      %p201 = scmp.lt.s32.totalorder %s18, 2
      // Predicated region
      $region29: #{tpu_custom_call.1} parent=5 // pred_check
        %p202 = pneg %p201
      $region30: #{tpu_custom_call.1} parent=5 // pred_check_branch
        %204 = sbr.rel (%p202) target = $region32
      $region31: #{tpu_custom_call.1} parent=5 // pred_region
        // Predicated region
        $region33: #{tpu_custom_call.1} parent=31 // pred_check
          %p205 = pneg %p38
        $region34: #{tpu_custom_call.1} parent=31 // pred_check_branch
          %207 = sbr.rel (%p205) target = $region36
        $region35: #{tpu_custom_call.1} parent=31 // pred_region
          %s208 = sand.u32 %s28, 1
          %s209 = scalar_lea.sflag [#allocation3], %s208
          %s210 = sand.u32 %s28, 1
          %s211 = smul.addr %s210, 8
          %s212 = scalar_lea.vmem [#allocation2], %s211
          %214 = vsyncadd %s209, 0
          %s215 = smul.addr %s18, 8
          %s216 = scalar_lea.hbm %s0, %s215
          %s218 = sshll.u32 %s216, 4
          %s219 = int_to_ptr.hbm [resolvable:$true] %s218
          %s220 = sshll.u32 %s212, 4
          %s221 = int_to_ptr.vmem [resolvable:$true] %s220
          %223 = dma.hbm_to_vmem [thread:$0]  %s219, 128, %s221, %s209
        $region36: #{tpu_custom_call.1} parent=31 // pred_fallthru
          _
      $region32: #{tpu_custom_call.1} parent=5 // pred_fallthru
        _
      %p224 = scmp.le.s32.totalorder 1, %s18
      %p225 = scmp.lt.s32.totalorder %s18, 3
      %p226 = pnand %p224, %p225
      %p227 = pneg %p226
      // Predicated region
      $region37: #{tpu_custom_call.1} parent=5 // pred_check
        _
      $region38: #{tpu_custom_call.1} parent=5 // pred_check_branch
        %229 = sbr.rel (%p226) target = $region40
      $region39: #{tpu_custom_call.1} parent=5 // pred_region
        %s230 = ssub.s32 %s18, 1
        %s231 = sand.u32 %s31, 1
        %s232 = scalar_lea.sflag [#allocation3], %s231
        %s233 = sand.u32 %s31, 1
        %s234 = smul.addr %s233, 8
        %s235 = scalar_lea.vmem [#allocation2], %s234
        // Predicated region
        $region41: #{tpu_custom_call.1} parent=39 // pred_check
          %p236 = pneg %p44
        $region42: #{tpu_custom_call.1} parent=39 // pred_check_branch
          %238 = sbr.rel (%p236) target = $region44
        $region43: #{tpu_custom_call.1} parent=39 // pred_region
          %240 = dma.done %s232, 128
        $region44: #{tpu_custom_call.1} parent=39 // pred_fallthru
          _
        // Predicated region
        $region45: #{tpu_custom_call.1} parent=39 // pred_check
          %p241 = pneg %p65
        $region46: #{tpu_custom_call.1} parent=39 // pred_check_branch
          %243 = sbr.rel (%p241) target = $region48
        $region47: #{tpu_custom_call.1} parent=39 // pred_region
          %245 = dma.done [#allocation6], 2560
        $region48: #{tpu_custom_call.1} parent=39 // pred_fallthru
          _
        // Predicated region
        $region49: #{tpu_custom_call.1} parent=39 // pred_check
          %p246 = pneg %p128
        $region50: #{tpu_custom_call.1} parent=39 // pred_check_branch
          %248 = sbr.rel (%p246) target = $region52
        $region51: #{tpu_custom_call.1} parent=39 // pred_region
          %250 = dma.done [#allocation6], 256
        $region52: #{tpu_custom_call.1} parent=39 // pred_fallthru
          _
        %s251 = sand.u32 %s31, 1
        %s252 = scalar_lea.sflag [#allocation3], %s251
        %s253 = sand.u32 %s31, 1
        %s254 = smul.addr %s253, 8
        %s255 = scalar_lea.vmem [#allocation2], %s254
        %p256 = pneg %p44
        %p257 = pneg %p41
        %p258 = pneg %p65
        %p259 = pneg %p62
        %p260 = pneg %p86
        %p261 = pneg %p83
        %p262 = pneg %p107
        %p263 = pneg %p104
        %p264 = pneg %p128
        %p265 = pneg %p125
        %p266 = pneg %p154
        %p267 = pneg %p151
        %s268 = sand.u32 %s141, 1
        %s269 = scalar_lea.sflag [#allocation4], %s268
        %s270 = sand.u32 %s141, 1
        %s271 = smul.addr %s270, 16
        %s272 = scalar_lea.vmem [#allocation8], %s271
        %v273 = vld [vmem:[%s235] sm:$0xff]
        %v274 = vld [vmem:[#allocation5] sm:$0xff]
        %v275 = vld [vmem:[#allocation5 + $0x8] sm:$0xff]
        %v276 = vld [vmem:[#allocation5 + $0x10] sm:$0xff]
        %v277 = vld [vmem:[#allocation5 + $0x18] sm:$0xff]
        %v278 = vld [vmem:[#allocation5 + $0x20] sm:$0xff]
        %v279 = vld [vmem:[#allocation5 + $0x28] sm:$0xff]
        %v280 = vld [vmem:[#allocation5 + $0x30] sm:$0xff]
        %v281 = vld [vmem:[#allocation5 + $0x38] sm:$0xff]
        %v282 = vld [vmem:[#allocation5 + $0x40] sm:$0xff]
        %v283 = vld [vmem:[#allocation5 + $0x48] sm:$0xff]
        %v284 = vld [vmem:[#allocation5 + $0x50] sm:$0xff]
        %v285 = vld [vmem:[#allocation5 + $0x58] sm:$0xff]
        %v286 = vld [vmem:[#allocation5 + $0x60] sm:$0xff]
        %v287 = vld [vmem:[#allocation5 + $0x68] sm:$0xff]
        %v288 = vld [vmem:[#allocation5 + $0x70] sm:$0xff]
        %v289 = vld [vmem:[#allocation5 + $0x78] sm:$0xff]
        %v290 = vld [vmem:[#allocation5 + $0x80] sm:$0xff]
        %v291 = vld [vmem:[#allocation5 + $0x88] sm:$0xff]
        %v292 = vld [vmem:[#allocation5 + $0x90] sm:$0xff]
        %v293 = vld [vmem:[#allocation5 + $0x98] sm:$0xff]
        %vm294 = vcmask 654336
        %v296 = vsel %vm294, %v273, 0
        %298 = vmatpush.msra.mxu0 0.0
        %299 = vmatpush.msra.mxu0 0.0
        %300 = vmatpush.msra.mxu0 0.0
        %301 = vmatpush.msra.mxu0 0.0
        %302 = vmatpush.msra.mxu0 0.0
        %303 = vmatpush.msra.mxu0 0.0
        %304 = vmatpush.msra.mxu0 %v292
        %305 = vmatpush.msra.mxu0 %v290
        %306 = vmatpush.msra.mxu0 %v288
        %307 = vmatpush.msra.mxu0 %v286
        %308 = vmatpush.msra.mxu0 %v284
        %309 = vmatpush.msra.mxu0 %v282
        %310 = vmatpush.msra.mxu0 %v280
        %311 = vmatpush.msra.mxu0 %v278
        %312 = vmatpush.msra.mxu0 %v276
        %313 = vmatpush.msra.mxu0 %v274
        %314 = vmatmul.f32.gmra.mxu0 %v296
        %v315 = vpop.f32.mrf.mxu0
        %v316 = vadd.f32 0.0, %v315
        %317 = vdwg.mxu0
        %318 = vmatpush.msra.mxu0 0.0
        %319 = vmatpush.msra.mxu0 0.0
        %320 = vmatpush.msra.mxu0 0.0
        %321 = vmatpush.msra.mxu0 0.0
        %322 = vmatpush.msra.mxu0 0.0
        %323 = vmatpush.msra.mxu0 0.0
        %324 = vmatpush.msra.mxu0 %v293
        %325 = vmatpush.msra.mxu0 %v291
        %326 = vmatpush.msra.mxu0 %v289
        %327 = vmatpush.msra.mxu0 %v287
        %328 = vmatpush.msra.mxu0 %v285
        %329 = vmatpush.msra.mxu0 %v283
        %330 = vmatpush.msra.mxu0 %v281
        %331 = vmatpush.msra.mxu0 %v279
        %332 = vmatpush.msra.mxu0 %v277
        %333 = vmatpush.msra.mxu0 %v275
        %334 = vmatmul.f32.gmra.mxu0 %v296
        %v335 = vpop.f32.mrf.mxu0
        %v336 = vadd.f32 0.0, %v335
        %337 = vdwg.mxu0
        %338 = vrot.lane.b32.xlu0 %v316, 17
        %v339 = vpop.permute.xlu0 %338
        %340 = vrot.lane.b32.xlu0 %v336, 17
        %v341 = vpop.permute.xlu0 %340
        %v342 = vlaneseq
        %v343 = vand.u32 %v342, 127
        %vm344 = vcmp.lt.s32.totalorder %v343, 17
        %v345 = vsel %vm344, %v339, %v341
        %v346 = vsel %vm344, %v341, %v339
        %v347 = vld [vmem:[#allocation7] ss:$8 sm:$0x3]
        %v349 = vperm.slane %v347, 0
        %v350 = vperm.slane %v347, 1
        %v353 = vmul.f32 %v346, %v349
        %v354 = vmul.f32 %v345, %v350
        %355 = vrot.lane.b32.xlu0 %v316, 16
        %v356 = vpop.permute.xlu0 %355
        %357 = vrot.lane.b32.xlu0 %v336, 16
        %v358 = vpop.permute.xlu0 %357
        %vm359 = vcmp.lt.s32.totalorder %v343, 16
        %v360 = vsel %vm359, %v356, %v358
        %v361 = vsel %vm359, %v358, %v356
        %s362 = scalar_lea.vmem [#allocation7], 1
        %v363 = vld [vmem:[%s362] ss:$8 sm:$0x3]
        %v365 = vperm.slane %v363, 0
        %v366 = vperm.slane %v363, 1
        %v369 = vmul.f32 %v361, %v365
        %v370 = vmul.f32 %v360, %v366
        %371 = vrot.lane.b32.xlu0 %v316, 15
        %v372 = vpop.permute.xlu0 %371
        %373 = vrot.lane.b32.xlu0 %v336, 15
        %v374 = vpop.permute.xlu0 %373
        %vm375 = vcmp.lt.s32.totalorder %v343, 15
        %v376 = vsel %vm375, %v372, %v374
        %v377 = vsel %vm375, %v374, %v372
        %s378 = scalar_lea.vmem [#allocation7], 2
        %v379 = vld [vmem:[%s378] ss:$8 sm:$0x3]
        %v381 = vperm.slane %v379, 0
        %v382 = vperm.slane %v379, 1
        %v385 = vmul.f32 %v377, %v381
        %v386 = vmul.f32 %v376, %v382
        %387 = vrot.lane.b32.xlu0 %v316, 1
        %v388 = vpop.permute.xlu0 %387
        %389 = vrot.lane.b32.xlu0 %v336, 1
        %v390 = vpop.permute.xlu0 %389
        %vm391 = vcmp.lt.s32.totalorder %v343, 1
        %v392 = vsel %vm391, %v388, %v390
        %v393 = vsel %vm391, %v390, %v388
        %s394 = scalar_lea.vmem [#allocation7], 3
        %v395 = vld [vmem:[%s394] ss:$8 sm:$0x3]
        %v397 = vperm.slane %v395, 0
        %v398 = vperm.slane %v395, 1
        %v401 = vmul.f32 %v393, %v397
        %v402 = vmul.f32 %v392, %v398
        %403 = vrot.lane.b32.xlu0 %v316, 127
        %v404 = vpop.permute.xlu0 %403
        %405 = vrot.lane.b32.xlu0 %v336, 127
        %v406 = vpop.permute.xlu0 %405
        %vm407 = vcmp.lt.s32.totalorder %v343, 127
        %v408 = vsel %vm407, %v404, %v406
        %v409 = vsel %vm407, %v406, %v404
        %s410 = scalar_lea.vmem [#allocation7], 4
        %v411 = vld [vmem:[%s410] ss:$8 sm:$0x3]
        %v413 = vperm.slane %v411, 0
        %v414 = vperm.slane %v411, 1
        %v417 = vmul.f32 %v408, %v413
        %v418 = vmul.f32 %v409, %v414
        %419 = vrot.lane.b32.xlu0 %v316, 113
        %v420 = vpop.permute.xlu0 %419
        %421 = vrot.lane.b32.xlu0 %v336, 113
        %v422 = vpop.permute.xlu0 %421
        %vm423 = vcmp.lt.s32.totalorder %v343, 113
        %v424 = vsel %vm423, %v420, %v422
        %v425 = vsel %vm423, %v422, %v420
        %s426 = scalar_lea.vmem [#allocation7], 5
        %v427 = vld [vmem:[%s426] ss:$8 sm:$0x3]
        %v429 = vperm.slane %v427, 0
        %v430 = vperm.slane %v427, 1
        %v433 = vmul.f32 %v424, %v429
        %v434 = vmul.f32 %v425, %v430
        %435 = vrot.lane.b32.xlu0 %v316, 112
        %v436 = vpop.permute.xlu0 %435
        %437 = vrot.lane.b32.xlu0 %v336, 112
        %v438 = vpop.permute.xlu0 %437
        %vm439 = vcmp.lt.s32.totalorder %v343, 112
        %v440 = vsel %vm439, %v436, %v438
        %v441 = vsel %vm439, %v438, %v436
        %s442 = scalar_lea.vmem [#allocation7], 6
        %v443 = vld [vmem:[%s442] ss:$8 sm:$0x3]
        %v445 = vperm.slane %v443, 0
        %v446 = vperm.slane %v443, 1
        %v449 = vmul.f32 %v440, %v445
        %v450 = vmul.f32 %v441, %v446
        %451 = vrot.lane.b32.xlu0 %v316, 111
        %v452 = vpop.permute.xlu0 %451
        %453 = vrot.lane.b32.xlu0 %v336, 111
        %v454 = vpop.permute.xlu0 %453
        %vm455 = vcmp.lt.s32.totalorder %v343, 111
        %v456 = vsel %vm455, %v452, %v454
        %v457 = vsel %vm455, %v454, %v452
        %s458 = scalar_lea.vmem [#allocation7], 7
        %v459 = vld [vmem:[%s458] ss:$8 sm:$0x3]
        %v461 = vperm.slane %v459, 0
        %v462 = vperm.slane %v459, 1
        %v465 = vmul.f32 %v456, %v461
        %v466 = vmul.f32 %v457, %v462
        %v467 = vld [vmem:[%s2] sm:$0xff]
        %v468 = vld [vmem:[%s3] sm:$0xff]
        %470 = vset.pattern.permute.xlu0 0
        %471 = vperm.xlu0 %470, %v468
        %v472 = vpop.permute.xlu0 %471
        %vm474 = vcmask 588800
        %v476 = vsel %vm474, %v467, 0
        %478 = vmatpush.msra.mxu0 0.0
        %479 = vmatpush.msra.mxu0 0.0
        %480 = vmatpush.msra.mxu0 0.0
        %481 = vmatpush.msra.mxu0 0.0
        %482 = vmatpush.msra.mxu0 0.0
        %483 = vmatpush.msra.mxu0 0.0
        %484 = vmatpush.msra.mxu0 0.0
        %485 = vmatpush.msra.mxu0 %v465
        %486 = vmatpush.msra.mxu0 %v449
        %487 = vmatpush.msra.mxu0 %v433
        %488 = vmatpush.msra.mxu0 %v417
        %489 = vmatpush.msra.mxu0 %v316
        %490 = vmatpush.msra.mxu0 %v401
        %491 = vmatpush.msra.mxu0 %v385
        %492 = vmatpush.msra.mxu0 %v369
        %493 = vmatpush.msra.mxu0 %v353
        %494 = vmatmul.f32.gmra.mxu0 %v476
        %v495 = vpop.f32.mrf.mxu0
        %v496 = vadd.f32 %v472, %v495
        %497 = vdwg.mxu0
        %498 = vmatpush.msra.mxu0 0.0
        %499 = vmatpush.msra.mxu0 0.0
        %500 = vmatpush.msra.mxu0 0.0
        %501 = vmatpush.msra.mxu0 0.0
        %502 = vmatpush.msra.mxu0 0.0
        %503 = vmatpush.msra.mxu0 0.0
        %504 = vmatpush.msra.mxu0 0.0
        %505 = vmatpush.msra.mxu0 %v466
        %506 = vmatpush.msra.mxu0 %v450
        %507 = vmatpush.msra.mxu0 %v434
        %508 = vmatpush.msra.mxu0 %v418
        %509 = vmatpush.msra.mxu0 %v336
        %510 = vmatpush.msra.mxu0 %v402
        %511 = vmatpush.msra.mxu0 %v386
        %512 = vmatpush.msra.mxu0 %v370
        %513 = vmatpush.msra.mxu0 %v354
        %514 = vmatmul.f32.gmra.mxu0 %v476
        %v515 = vpop.f32.mrf.mxu0
        %v516 = vadd.f32 %v472, %v515
        %517 = vdwg.mxu0
        %v518 = vmul.f32 %v496, 0.01
        %v519 = vmul.f32 %v516, 0.01
        %v520 = vmax.f32 %v496, %v518
        %v521 = vmax.f32 %v516, %v519
        %522 = vst [vmem:[%s272] sm:$0xff] %v520
        %523 = vst [vmem:[%s272 + $0x8] sm:$0xff] %v521
        %s524 = sand.u32 %s141, 1
        %s525 = scalar_lea.sflag [#allocation4], %s524
        %s526 = sand.u32 %s141, 1
        %s527 = smul.addr %s526, 16
        %s528 = scalar_lea.vmem [#allocation8], %s527
        // Predicated region
        $region53: #{tpu_custom_call.1} parent=39 // pred_check
          %p529 = pneg %p151
        $region54: #{tpu_custom_call.1} parent=39 // pred_check_branch
          %531 = sbr.rel (%p529) target = $region56
        $region55: #{tpu_custom_call.1} parent=39 // pred_region
          %533 = vsyncadd %s525, 0
          %s534 = smul.addr %s23, 2
          %s535 = smul.addr %s534, 8
          %s536 = scalar_lea.hbm %s5, %s535
          %s538 = sshll.u32 %s528, 4
          %s539 = int_to_ptr.vmem [resolvable:$true] %s538
          %s540 = sshll.u32 %s536, 4
          %s541 = int_to_ptr.hbm [resolvable:$true] %s540
          %543 = dma.vmem_to_hbm [thread:$0]  %s539, 256, %s541, %s525
        $region56: #{tpu_custom_call.1} parent=39 // pred_fallthru
          _
      $region40: #{tpu_custom_call.1} parent=5 // pred_fallthru
        _
      %p544 = scmp.le.s32.totalorder 2, %s18
      // Predicated region
      $region57: #{tpu_custom_call.1} parent=5 // pred_check
        %p545 = pneg %p544
      $region58: #{tpu_custom_call.1} parent=5 // pred_check_branch
        %547 = sbr.rel (%p545) target = $region60
      $region59: #{tpu_custom_call.1} parent=5 // pred_region
        %s548 = ssub.s32 %s18, 2
        // Predicated region
        $region61: #{tpu_custom_call.1} parent=59 // pred_check
          %p549 = pneg %p157
        $region62: #{tpu_custom_call.1} parent=59 // pred_check_branch
          %551 = sbr.rel (%p549) target = $region64
        $region63: #{tpu_custom_call.1} parent=59 // pred_region
          %s552 = sand.u32 %s142, 1
          %s553 = scalar_lea.sflag [#allocation4], %s552
          %s554 = sand.u32 %s142, 1
          %s555 = smul.addr %s554, 16
          %s556 = scalar_lea.vmem [#allocation8], %s555
          %558 = dma.done %s553, 256
        $region64: #{tpu_custom_call.1} parent=59 // pred_fallthru
          _
      $region60: #{tpu_custom_call.1} parent=5 // pred_fallthru
        _
    $region6: #{tpu_custom_call.1} parent=1 // loop_footer
      %s22 = sadd.s32 1, %s18
    $region7: #{tpu_custom_call.1} parent=1 // loop_footer_branch
      %17 = sbr.rel target = $region3
    $region8: #{tpu_custom_call.1} parent=1 // loop_exit
      _
    %559 = vsyncpa [#allocation3], 1
    %s560 = scalar_lea.sflag [#allocation3], 1
    %561 = vsyncpa %s560, 1
    %562 = vsyncpa [#allocation6], 1
    %563 = vsyncpa [#allocation4], 1
    %s564 = scalar_lea.sflag [#allocation4], 1
    %565 = vsyncpa %s564, 1

</llo_original>
